<compile_context>
chip_gen: v6e
topology: v6e:2x2x1
jax: 0.10.0
libtpu: 0.0.40
codegen_flags: <defaults>
</compile_context>

<pallas_src>
import jax
import jax.numpy as jnp
from jax import lax
from jax.experimental import pallas as pl
from jax.experimental.pallas import tpu as pltpu


def _round_up(x, m):
    return (x + m - 1) // m * m


def _fusionnet_kernel(t_ref, s_ref, w1t_ref, w1s_ref, b1_ref, w2_ref, b2_ref, oT_ref):
    # t_ref  : (tile_b, Td) f32      s_ref  : (tile_b, Sd) f32   (streamed inputs)
    # w1t_ref: (64, Td)  bf16        w1s_ref: (64, Sd)  bf16     b1_ref: (64, 1) f32
    # w2_ref : (out_pad, 64) bf16    b2_ref : (out_pad, 1) f32
    # oT_ref : (out_pad, tile_b) f32 (lane-dense, transposed)
    t = t_ref[...].astype(jnp.bfloat16)          # cast in-kernel; hides under DMA
    s = s_ref[...].astype(jnp.bfloat16)

    # fc1 fused with the concat: h_T = W1[:, :Td] @ t^T + W1[:, Td:] @ s^T -> (64, tile_b)
    dn = (((1,), (1,)), ((), ()))                # contract on the feature axis of both
    h = lax.dot_general(w1t_ref[...], t, dn, preferred_element_type=jnp.float32)
    h = h + lax.dot_general(w1s_ref[...], s, dn, preferred_element_type=jnp.float32)
    h = jnp.maximum(h + b1_ref[...], 0.0)        # bias + ReLU in f32

    # fc2: (out_pad, 64) @ (64, tile_b) -> (out_pad, tile_b), lane-dense store
    out = jnp.dot(w2_ref[...], h.astype(jnp.bfloat16),
                  preferred_element_type=jnp.float32)
    oT_ref[...] = out + b2_ref[...]


def _choose_tile_b(batch, max_tile_b):
    """Lane tile: multiple of 128, <= max_tile_b, >= 2 grid steps for big batches
    so a 2-TC chip (v7x megacore) keeps both cores busy."""
    b128 = _round_up(batch, 128)
    if b128 <= max_tile_b:
        n_tiles = 2 if b128 >= 4096 else 1
    else:
        n_tiles = max(2, pl.cdiv(b128, max_tile_b))
    return _round_up(pl.cdiv(b128, n_tiles), 128)


def fusionnet_forward(time_features, space_features, params, *, tile_b=None,
                      max_tile_b=16384):
    """params: w1 (64, Td+Sd) bf16, b1 (64,1) f32, w2 (out,64) bf16, b2 (out,1) f32.
    Returns (B, out) f32."""
    w1, b1, w2, b2 = params["w1"], params["b1"], params["w2"], params["b2"]
    B, t_dim = time_features.shape
    s_dim = space_features.shape[1]
    out_dim = w2.shape[0]
    assert w1.shape[1] == t_dim + s_dim

    if tile_b is None:
        tile_b = _choose_tile_b(B, max_tile_b)
    if tile_b <= 0 or tile_b % 128 != 0:
        raise ValueError(f"tile_b must be a positive multiple of 128, got {tile_b}")

    # Fuse torch.cat by splitting fc1's (tiny) weight instead of concatenating the
    # (large, streamed) activations.
    w1t = w1[:, :t_dim]
    w1s = w1[:, t_dim:]

    # Pad out_dim (2) up to a full 8-sublane row block; extra rows are zero and
    # sliced off below, so the fc2 result and output stores are unmasked.
    out_pad = _round_up(out_dim, 8)
    if out_pad != out_dim:
        w2 = jnp.pad(w2, ((0, out_pad - out_dim), (0, 0)))
        b2 = jnp.pad(b2, ((0, out_pad - out_dim), (0, 0)))

    grid = (pl.cdiv(B, tile_b),)   # ragged final tile handled by Pallas masking

    outT = pl.pallas_call(
        _fusionnet_kernel,
        out_shape=jax.ShapeDtypeStruct((out_pad, B), jnp.float32),
        grid=grid,
        in_specs=[
            pl.BlockSpec((tile_b, t_dim), lambda i: (i, 0)),   # streamed, batch-major
            pl.BlockSpec((tile_b, s_dim), lambda i: (i, 0)),
            pl.BlockSpec(w1t.shape, lambda i: (0, 0)),         # weights VMEM-resident
            pl.BlockSpec(w1s.shape, lambda i: (0, 0)),
            pl.BlockSpec(b1.shape, lambda i: (0, 0)),
            pl.BlockSpec(w2.shape, lambda i: (0, 0)),
            pl.BlockSpec(b2.shape, lambda i: (0, 0)),
        ],
        out_specs=pl.BlockSpec((out_pad, tile_b), lambda i: (0, i)),
        compiler_params=pltpu.CompilerParams(
            dimension_semantics=("parallel",),   # megacore split on 2-TC chips
        ),
    )(time_features, space_features, w1t, w1s, b1, w2, b2)

    # Module-facing (B, out_dim) layout; transposing a (2, B) sliver is cheap.
    return outT[:out_dim, :].T


def init_params(time_feature_dim=16, space_feature_dim=32, hidden=64, output_dim=2,
                seed=0):
    """Deterministic synthetic parameters mirroring nn.Linear (weights stored (out, in))."""
    key = jax.random.PRNGKey(seed)
    k1, k2, k3, k4 = jax.random.split(key, 4)
    in1 = time_feature_dim + space_feature_dim
    bound1 = 1.0 / jnp.sqrt(in1)
    bound2 = 1.0 / jnp.sqrt(hidden)
    w1 = jax.random.uniform(k1, (hidden, in1), jnp.float32, -bound1, bound1)
    b1 = jax.random.uniform(k2, (hidden, 1), jnp.float32, -bound1, bound1)
    w2 = jax.random.uniform(k3, (output_dim, hidden), jnp.float32, -bound2, bound2)
    b2 = jax.random.uniform(k4, (output_dim, 1), jnp.float32, -bound2, bound2)
    return {
        "w1": w1.astype(jnp.bfloat16),
        "b1": b1,
        "w2": w2.astype(jnp.bfloat16),
        "b2": b2,
    }


def reference_forward(time_features, space_features, params):
    """Pure-JAX reference with the same bf16-input / f32-accumulate numerics."""
    x = jnp.concatenate([time_features, space_features], axis=1).astype(jnp.bfloat16)
    h = jnp.dot(x, params["w1"].T, preferred_element_type=jnp.float32) + params["b1"].T
    h = jnp.maximum(h, 0.0).astype(jnp.bfloat16)
    out = jnp.dot(h, params["w2"].T, preferred_element_type=jnp.float32) + params["b2"].T
    return out


if __name__ == "__main__":
    T, S, OUT = 16, 32, 2
    params = init_params(time_feature_dim=T, space_feature_dim=S, output_dim=OUT)

    key = jax.random.PRNGKey(0)
    kt, ks, kt2, ks2 = jax.random.split(key, 4)

    # Small demo batch (B=2): single 128-lane tile, partial lane/sublane blocks.
    B = 2
    tf = jax.random.normal(kt, (B, T), jnp.float32)
    sf = jax.random.normal(ks, (B, S), jnp.float32)
    out = jax.block_until_ready(fusionnet_forward(tf, sf, params))
    ref = reference_forward(tf, sf, params)
    assert out.shape == (B, OUT), out.shape
    assert jnp.allclose(out, ref, atol=2e-2, rtol=2e-2), "mismatch vs reference (B=2)"

    # Non-multiple-of-128 batch with a forced small tile: multi-step grid with a
    # ragged final tile; weights stay VMEM-resident across steps.
    B2 = 300
    tf2 = jax.random.normal(kt2, (B2, T), jnp.float32)
    sf2 = jax.random.normal(ks2, (B2, S), jnp.float32)
    out2 = jax.block_until_ready(fusionnet_forward(tf2, sf2, params, tile_b=128))
    ref2 = reference_forward(tf2, sf2, params)
    assert out2.shape == (B2, OUT), out2.shape
    assert jnp.allclose(out2, ref2, atol=2e-2, rtol=2e-2), "mismatch vs reference (B=300)"

    print("KERNEL_OK")
</pallas_src>

<mosaic_0001>
module attributes {stable_mosaic.version = 11 : i64} {
  func.func @_fusionnet_kernel(%arg0: i32, %arg1: memref<128x16xf32, #tpu.memory_space<vmem>>, %arg2: memref<128x32xf32, #tpu.memory_space<vmem>>, %arg3: memref<64x16xbf16, #tpu.memory_space<vmem>>, %arg4: memref<64x32xbf16, #tpu.memory_space<vmem>>, %arg5: memref<64x1xf32, #tpu.memory_space<vmem>>, %arg6: memref<8x64xbf16, #tpu.memory_space<vmem>>, %arg7: memref<8x1xf32, #tpu.memory_space<vmem>>, %arg8: memref<8x128xf32, #tpu.memory_space<vmem>>) attributes {dimension_semantics = [#tpu.dimension_semantics<parallel>], iteration_bounds = array<i64: 1>, scalar_prefetch = 0 : i64, scratch_operands = 0 : i64, tpu.core_type = #tpu.core_type<tc>, window_params = [{transform_indices = @transform_0, window_bounds = array<i64: 128, 16>}, {transform_indices = @transform_1, window_bounds = array<i64: 128, 32>}, {pipeline_mode = #tpu.pipeline_mode<synchronous>, transform_indices = @transform_2, window_bounds = array<i64: 64, 16>}, {pipeline_mode = #tpu.pipeline_mode<synchronous>, transform_indices = @transform_3, window_bounds = array<i64: 64, 32>}, {pipeline_mode = #tpu.pipeline_mode<synchronous>, transform_indices = @transform_4, window_bounds = array<i64: 64, 1>}, {pipeline_mode = #tpu.pipeline_mode<synchronous>, transform_indices = @transform_5, window_bounds = array<i64: 8, 64>}, {pipeline_mode = #tpu.pipeline_mode<synchronous>, transform_indices = @transform_6, window_bounds = array<i64: 8, 1>}, {transform_indices = @transform_7, window_bounds = array<i64: 8, 128>}]} {
    %c0 = arith.constant 0 : index
    %c0_0 = arith.constant 0 : index
    %0 = vector.load %arg1[%c0, %c0_0] : memref<128x16xf32, #tpu.memory_space<vmem>>, vector<128x16xf32>
    %1 = arith.truncf %0 : vector<128x16xf32> to vector<128x16xbf16>
    %c0_1 = arith.constant 0 : index
    %c0_2 = arith.constant 0 : index
    %2 = vector.load %arg2[%c0_1, %c0_2] : memref<128x32xf32, #tpu.memory_space<vmem>>, vector<128x32xf32>
    %3 = arith.truncf %2 : vector<128x32xf32> to vector<128x32xbf16>
    %c0_3 = arith.constant 0 : index
    %c0_4 = arith.constant 0 : index
    %4 = vector.load %arg3[%c0_3, %c0_4] : memref<64x16xbf16, #tpu.memory_space<vmem>>, vector<64x16xbf16>
    %cst = arith.constant dense<0.000000e+00> : vector<64x128xf32>
    %5 = tpu.matmul %4, %1, %cst {dimension_numbers = #tpu.dot_dimension_numbers<[1], [1], [0], [0], [0, 0, 1, 0], [], []>} : vector<64x16xbf16>, vector<128x16xbf16>, vector<64x128xf32> -> vector<64x128xf32>
    %c0_5 = arith.constant 0 : index
    %c0_6 = arith.constant 0 : index
    %6 = vector.load %arg4[%c0_5, %c0_6] : memref<64x32xbf16, #tpu.memory_space<vmem>>, vector<64x32xbf16>
    %cst_7 = arith.constant dense<0.000000e+00> : vector<64x128xf32>
    %7 = tpu.matmul %6, %3, %cst_7 {dimension_numbers = #tpu.dot_dimension_numbers<[1], [1], [0], [0], [0, 0, 1, 0], [], []>} : vector<64x32xbf16>, vector<128x32xbf16>, vector<64x128xf32> -> vector<64x128xf32>
    %8 = arith.addf %5, %7 : vector<64x128xf32>
    %c0_8 = arith.constant 0 : index
    %c0_9 = arith.constant 0 : index
    %9 = vector.load %arg5[%c0_8, %c0_9] : memref<64x1xf32, #tpu.memory_space<vmem>>, vector<64x1xf32>
    %10 = vector.broadcast %9 : vector<64x1xf32> to vector<64x128xf32>
    %11 = arith.addf %8, %10 : vector<64x128xf32>
    %cst_10 = arith.constant 0.000000e+00 : f32
    %12 = vector.broadcast %cst_10 : f32 to vector<64x128xf32>
    %13 = arith.maximumf %11, %12 : vector<64x128xf32>
    %c0_11 = arith.constant 0 : index
    %c0_12 = arith.constant 0 : index
    %14 = vector.load %arg6[%c0_11, %c0_12] : memref<8x64xbf16, #tpu.memory_space<vmem>>, vector<8x64xbf16>
    %15 = arith.truncf %13 : vector<64x128xf32> to vector<64x128xbf16>
    %cst_13 = arith.constant dense<0.000000e+00> : vector<8x128xf32>
    %16 = tpu.matmul %14, %15, %cst_13 {dimension_numbers = #tpu.dot_dimension_numbers<[1], [0], [0], [1], [0, 0, 1, 1], [], []>} : vector<8x64xbf16>, vector<64x128xbf16>, vector<8x128xf32> -> vector<8x128xf32>
    %c0_14 = arith.constant 0 : index
    %c0_15 = arith.constant 0 : index
    %17 = vector.load %arg7[%c0_14, %c0_15] : memref<8x1xf32, #tpu.memory_space<vmem>>, vector<8x1xf32>
    %18 = vector.broadcast %17 : vector<8x1xf32> to vector<8x128xf32>
    %19 = arith.addf %16, %18 : vector<8x128xf32>
    %c0_16 = arith.constant 0 : index
    %c0_17 = arith.constant 0 : index
    %20 = vector.load %arg8[%c0_16, %c0_17] : memref<8x128xf32, #tpu.memory_space<vmem>>, vector<8x128xf32>
    tpu.vector_store %arg8[%c0_16, %c0_17], %19 {strides = array<i32>} : memref<8x128xf32, #tpu.memory_space<vmem>>, vector<8x128xf32>,
    return
  }
  func.func @transform_0(%arg0: i32) -> (i32, i32) {
    %c0_i32 = arith.constant 0 : i32
    %c0_i32_0 = arith.constant 0 : i32
    return %arg0, %c0_i32 : i32, i32
  }
  func.func @transform_1(%arg0: i32) -> (i32, i32) {
    %c0_i32 = arith.constant 0 : i32
    %c0_i32_0 = arith.constant 0 : i32
    return %arg0, %c0_i32 : i32, i32
  }
  func.func @transform_2(%arg0: i32) -> (i32, i32) {
    %c0_i32 = arith.constant 0 : i32
    %c0_i32_0 = arith.constant 0 : i32
    %c0_i32_1 = arith.constant 0 : i32
    return %c0_i32, %c0_i32_0 : i32, i32
  }
  func.func @transform_3(%arg0: i32) -> (i32, i32) {
    %c0_i32 = arith.constant 0 : i32
    %c0_i32_0 = arith.constant 0 : i32
    %c0_i32_1 = arith.constant 0 : i32
    return %c0_i32, %c0_i32_0 : i32, i32
  }
  func.func @transform_4(%arg0: i32) -> (i32, i32) {
    %c0_i32 = arith.constant 0 : i32
    %c0_i32_0 = arith.constant 0 : i32
    %c0_i32_1 = arith.constant 0 : i32
    return %c0_i32, %c0_i32_0 : i32, i32
  }
  func.func @transform_5(%arg0: i32) -> (i32, i32) {
    %c0_i32 = arith.constant 0 : i32
    %c0_i32_0 = arith.constant 0 : i32
    %c0_i32_1 = arith.constant 0 : i32
    return %c0_i32, %c0_i32_0 : i32, i32
  }
  func.func @transform_6(%arg0: i32) -> (i32, i32) {
    %c0_i32 = arith.constant 0 : i32
    %c0_i32_0 = arith.constant 0 : i32
    %c0_i32_1 = arith.constant 0 : i32
    return %c0_i32, %c0_i32_0 : i32, i32
  }
  func.func @transform_7(%arg0: i32) -> (i32, i32) {
    %c0_i32 = arith.constant 0 : i32
    %c0_i32_0 = arith.constant 0 : i32
    return %c0_i32, %arg0 : i32, i32
  }
}

</mosaic_0001>

<llo_original>
// kernel: tpu_custom_call.1
$region0: #{tpu_custom_call.1}
  #allocation0 [shape = 'u32[]', space=smem, size = 0x4, offset = 0x4, fixed_abs, tag = 'smem constant byte address 0x4 - core index']
  #allocation1 [shape = 'u32[144,128]{1,0:T(1,128)}', space=vmem, size = 0x12000, scoped, tag = 'internal scratch']
  %s0 = inlined_call_operand.vmem [shape: f32[2,16], index: 0, kind: input, shape index: {}]
  %s1 = inlined_call_operand.vmem [shape: f32[2,32], index: 1, kind: input, shape index: {}]
  %s2 = inlined_call_operand.vmem [shape: bf16[64,16], index: 2, kind: input, shape index: {}]
  %s3 = inlined_call_operand.vmem [shape: bf16[64,32], index: 3, kind: input, shape index: {}]
  %s4 = inlined_call_operand.vmem [shape: f32[64,1], index: 4, kind: input, shape index: {}]
  %s5 = inlined_call_operand.vmem [shape: bf16[8,64], index: 5, kind: input, shape index: {}]
  %s6 = inlined_call_operand.vmem [shape: f32[8,1], index: 6, kind: input, shape index: {}]
  %s7 = inlined_call_operand.vmem [shape: f32[8,2], index: 7, kind: output, shape index: {}]
  %s8 = sld [smem:[#allocation0]]
  $region38: #{tpu_custom_call.1} parent=0
    _
  %s10 = ssub.s32 1, %s8
  %s11 = scalar_select 0, %s10, %s8
  // Predicated region
  $region2: #{tpu_custom_call.1} parent=0 // pred_check
    _
  $region3: #{tpu_custom_call.1} parent=0 // pred_check_branch
    %13 = sbr.rel (0) target = $region5
  $region4: #{tpu_custom_call.1} parent=0 // pred_region
    _
  $region5: #{tpu_custom_call.1} parent=0 // pred_fallthru
    _
  // Predicated region
  $region6: #{tpu_custom_call.1} parent=0 // pred_check
    _
  $region7: #{tpu_custom_call.1} parent=0 // pred_check_branch
    %15 = sbr.rel (0) target = $region9
  $region8: #{tpu_custom_call.1} parent=0 // pred_region
    _
  $region9: #{tpu_custom_call.1} parent=0 // pred_fallthru
    _
  // Predicated region
  $region10: #{tpu_custom_call.1} parent=0 // pred_check
    _
  $region11: #{tpu_custom_call.1} parent=0 // pred_check_branch
    %17 = sbr.rel (0) target = $region13
  $region12: #{tpu_custom_call.1} parent=0 // pred_region
    _
  $region13: #{tpu_custom_call.1} parent=0 // pred_fallthru
    _
  // Predicated region
  $region14: #{tpu_custom_call.1} parent=0 // pred_check
    _
  $region15: #{tpu_custom_call.1} parent=0 // pred_check_branch
    %19 = sbr.rel (0) target = $region17
  $region16: #{tpu_custom_call.1} parent=0 // pred_region
    _
  $region17: #{tpu_custom_call.1} parent=0 // pred_fallthru
    _
  // Predicated region
  $region18: #{tpu_custom_call.1} parent=0 // pred_check
    _
  $region19: #{tpu_custom_call.1} parent=0 // pred_check_branch
    %21 = sbr.rel (0) target = $region21
  $region20: #{tpu_custom_call.1} parent=0 // pred_region
    _
  $region21: #{tpu_custom_call.1} parent=0 // pred_fallthru
    _
  // Predicated region
  $region22: #{tpu_custom_call.1} parent=0 // pred_check
    _
  $region23: #{tpu_custom_call.1} parent=0 // pred_check_branch
    %23 = sbr.rel (0) target = $region25
  $region24: #{tpu_custom_call.1} parent=0 // pred_region
    _
  $region25: #{tpu_custom_call.1} parent=0 // pred_fallthru
    _
  // Predicated region
  $region26: #{tpu_custom_call.1} parent=0 // pred_check
    _
  $region27: #{tpu_custom_call.1} parent=0 // pred_check_branch
    %25 = sbr.rel (0) target = $region29
  $region28: #{tpu_custom_call.1} parent=0 // pred_region
    _
  $region29: #{tpu_custom_call.1} parent=0 // pred_fallthru
    _
  %v27 = vld [vmem:[%s0] sm:$0xff]
  %v28 = vld [vmem:[%s0 + $0x8] sm:$0xff]
  %v29 = vld [vmem:[%s0 + $0x10] sm:$0xff]
  %v30 = vld [vmem:[%s0 + $0x18] sm:$0xff]
  %v31 = vld [vmem:[%s0 + $0x20] sm:$0xff]
  %v32 = vld [vmem:[%s0 + $0x28] sm:$0xff]
  %v33 = vld [vmem:[%s0 + $0x30] sm:$0xff]
  %v34 = vld [vmem:[%s0 + $0x38] sm:$0xff]
  %v35 = vld [vmem:[%s0 + $0x40] sm:$0xff]
  %v36 = vld [vmem:[%s0 + $0x48] sm:$0xff]
  %v37 = vld [vmem:[%s0 + $0x50] sm:$0xff]
  %v38 = vld [vmem:[%s0 + $0x58] sm:$0xff]
  %v39 = vld [vmem:[%s0 + $0x60] sm:$0xff]
  %v40 = vld [vmem:[%s0 + $0x68] sm:$0xff]
  %v41 = vld [vmem:[%s0 + $0x70] sm:$0xff]
  %v42 = vld [vmem:[%s0 + $0x78] sm:$0xff]
  %v43 = vpack.c.bf16 %v28, %v27
  %v44 = vpack.c.bf16 %v30, %v29
  %v45 = vpack.c.bf16 %v32, %v31
  %v46 = vpack.c.bf16 %v34, %v33
  %v47 = vpack.c.bf16 %v36, %v35
  %v48 = vpack.c.bf16 %v38, %v37
  %v49 = vpack.c.bf16 %v40, %v39
  %v50 = vpack.c.bf16 %v42, %v41
  %v51 = vld [vmem:[%s1] sm:$0xff]
  %v52 = vld [vmem:[%s1 + $0x8] sm:$0xff]
  %v53 = vld [vmem:[%s1 + $0x10] sm:$0xff]
  %v54 = vld [vmem:[%s1 + $0x18] sm:$0xff]
  %v55 = vld [vmem:[%s1 + $0x20] sm:$0xff]
  %v56 = vld [vmem:[%s1 + $0x28] sm:$0xff]
  %v57 = vld [vmem:[%s1 + $0x30] sm:$0xff]
  %v58 = vld [vmem:[%s1 + $0x38] sm:$0xff]
  %v59 = vld [vmem:[%s1 + $0x40] sm:$0xff]
  %v60 = vld [vmem:[%s1 + $0x48] sm:$0xff]
  %v61 = vld [vmem:[%s1 + $0x50] sm:$0xff]
  %v62 = vld [vmem:[%s1 + $0x58] sm:$0xff]
  %v63 = vld [vmem:[%s1 + $0x60] sm:$0xff]
  %v64 = vld [vmem:[%s1 + $0x68] sm:$0xff]
  %v65 = vld [vmem:[%s1 + $0x70] sm:$0xff]
  %v66 = vld [vmem:[%s1 + $0x78] sm:$0xff]
  %v67 = vpack.c.bf16 %v52, %v51
  %v68 = vpack.c.bf16 %v54, %v53
  %v69 = vpack.c.bf16 %v56, %v55
  %v70 = vpack.c.bf16 %v58, %v57
  %v71 = vpack.c.bf16 %v60, %v59
  %v72 = vpack.c.bf16 %v62, %v61
  %v73 = vpack.c.bf16 %v64, %v63
  %v74 = vpack.c.bf16 %v66, %v65
  %v75 = vld [vmem:[%s2] sm:$0xf]
  %v76 = vld [vmem:[%s2 + $0x4] sm:$0xf]
  %v77 = vld [vmem:[%s2 + $0x8] sm:$0xf]
  %v78 = vld [vmem:[%s2 + $0xc] sm:$0xf]
  %v79 = vld [vmem:[%s2 + $0x10] sm:$0xf]
  %v80 = vld [vmem:[%s2 + $0x14] sm:$0xf]
  %v81 = vld [vmem:[%s2 + $0x18] sm:$0xf]
  %v82 = vld [vmem:[%s2 + $0x1c] sm:$0xf]
  %v83 = vld [vmem:[%s3] sm:$0xf]
  %v84 = vld [vmem:[%s3 + $0x4] sm:$0xf]
  %v85 = vld [vmem:[%s3 + $0x8] sm:$0xf]
  %v86 = vld [vmem:[%s3 + $0xc] sm:$0xf]
  %v87 = vld [vmem:[%s3 + $0x10] sm:$0xf]
  %v88 = vld [vmem:[%s3 + $0x14] sm:$0xf]
  %v89 = vld [vmem:[%s3 + $0x18] sm:$0xf]
  %v90 = vld [vmem:[%s3 + $0x1c] sm:$0xf]
  %v99 = vunpack.c.l.b16 %v83
  %v100 = vunpack.c.l.b16 %v84
  %v101 = vunpack.c.l.b16 %v85
  %v102 = vunpack.c.l.b16 %v86
  %v103 = vunpack.c.l.b16 %v87
  %v104 = vunpack.c.l.b16 %v88
  %v105 = vunpack.c.l.b16 %v89
  %v106 = vunpack.c.l.b16 %v90
  %v107 = vpack.c.b16 %v100, %v99
  %v108 = vpack.c.b16 %v102, %v101
  %v109 = vpack.c.b16 %v104, %v103
  %v110 = vpack.c.b16 %v106, %v105
  %vm111 = vcmask 261120
  %v113 = vsel %vm111, %v107, 0
  %v116 = vsel %vm111, %v108, 0
  %v119 = vsel %vm111, %v109, 0
  %v122 = vsel %vm111, %v110, 0
  %v125 = vsel %vm111, %v67, 0
  %v128 = vsel %vm111, %v68, 0
  %v131 = vsel %vm111, %v69, 0
  %v134 = vsel %vm111, %v70, 0
  %v137 = vsel %vm111, %v71, 0
  %v140 = vsel %vm111, %v72, 0
  %v143 = vsel %vm111, %v73, 0
  %v146 = vsel %vm111, %v74, 0
  %148 = vmatprep.subr.bf16.mxu0 0
  %149 = vmatpush1.bf16.xpose.msra.mxu0 %v146
  %150 = vmatprep.subr.bf16.mxu0 0
  %151 = vmatpush1.bf16.xpose.msra.mxu0 %v143
  %152 = vmatprep.subr.bf16.mxu0 0
  %153 = vmatpush1.bf16.xpose.msra.mxu0 %v140
  %154 = vmatprep.subr.bf16.mxu0 0
  %155 = vmatpush1.bf16.xpose.msra.mxu0 %v137
  %156 = vmatprep.subr.bf16.mxu0 0
  %157 = vmatpush1.bf16.xpose.msra.mxu0 %v134
  %158 = vmatprep.subr.bf16.mxu0 0
  %159 = vmatpush1.bf16.xpose.msra.mxu0 %v131
  %160 = vmatprep.subr.bf16.mxu0 0
  %161 = vmatpush1.bf16.xpose.msra.mxu0 %v128
  %162 = vmatprep.subr.bf16.mxu0 0
  %163 = vmatpush1.bf16.xpose.msra.mxu0 %v125
  %164 = vmatprep.subr.bf16.mxu0 0
  %165 = vmatpush2.bf16.xpose.msra.mxu0 0
  %166 = vmatprep.subr.bf16.mxu0 0
  %167 = vmatpush2.bf16.xpose.msra.mxu0 0
  %168 = vmatprep.subr.bf16.mxu0 0
  %169 = vmatpush2.bf16.xpose.msra.mxu0 0
  %170 = vmatprep.subr.bf16.mxu0 0
  %171 = vmatpush2.bf16.xpose.msra.mxu0 0
  %172 = vmatprep.subr.bf16.mxu0 0
  %173 = vmatpush2.bf16.xpose.msra.mxu0 0
  %174 = vmatprep.subr.bf16.mxu0 0
  %175 = vmatpush2.bf16.xpose.msra.mxu0 0
  %176 = vmatprep.subr.bf16.mxu0 0
  %177 = vmatpush2.bf16.xpose.msra.mxu0 0
  %178 = vmatprep.subr.bf16.mxu0 0
  %179 = vmatpush2.bf16.xpose.msra.mxu0 0
  %180 = vmatprep.mubr.bf16.mxu0 0
  %181 = vmatmul.mubr.bf16.gmra.mxu0 %v113
  %v182 = vpop.f32.mrf.mxu0
  %v183 = vadd.f32 0.0, %v182
  %v184 = vpop.f32.mrf.mxu0
  %v185 = vpop.f32.mrf.mxu0
  %v186 = vadd.f32 0.0, %v185
  %v187 = vpop.f32.mrf.mxu0
  %188 = vmatprep.mubr.bf16.mxu0 0
  %189 = vmatmul.mubr.bf16.gmra.mxu0 %v116
  %v190 = vpop.f32.mrf.mxu0
  %v191 = vadd.f32 0.0, %v190
  %v192 = vpop.f32.mrf.mxu0
  %v193 = vpop.f32.mrf.mxu0
  %v194 = vadd.f32 0.0, %v193
  %v195 = vpop.f32.mrf.mxu0
  %196 = vmatprep.mubr.bf16.mxu0 0
  %197 = vmatmul.mubr.bf16.gmra.mxu0 %v119
  %v198 = vpop.f32.mrf.mxu0
  %v199 = vadd.f32 0.0, %v198
  %v200 = vpop.f32.mrf.mxu0
  %v201 = vpop.f32.mrf.mxu0
  %v202 = vadd.f32 0.0, %v201
  %v203 = vpop.f32.mrf.mxu0
  %204 = vmatprep.mubr.bf16.mxu0 0
  %205 = vmatmul.mubr.bf16.gmra.mxu0 %v122
  %v206 = vpop.f32.mrf.mxu0
  %v207 = vadd.f32 0.0, %v206
  %v208 = vpop.f32.mrf.mxu0
  %v209 = vpop.f32.mrf.mxu0
  %v210 = vadd.f32 0.0, %v209
  %v211 = vpop.f32.mrf.mxu0
  %212 = vdwg.mxu0
  %v221 = vunpack.c.l.b16 %v75
  %v222 = vunpack.c.l.b16 %v76
  %v223 = vunpack.c.l.b16 %v77
  %v224 = vunpack.c.l.b16 %v78
  %v225 = vunpack.c.l.b16 %v79
  %v226 = vunpack.c.l.b16 %v80
  %v227 = vunpack.c.l.b16 %v81
  %v228 = vunpack.c.l.b16 %v82
  %v229 = vpack.c.b16 %v222, %v221
  %v230 = vpack.c.b16 %v224, %v223
  %v231 = vpack.c.b16 %v226, %v225
  %v232 = vpack.c.b16 %v228, %v227
  %vm233 = vcmask 130048
  %v235 = vsel %vm233, %v229, 0
  %v238 = vsel %vm233, %v230, 0
  %v241 = vsel %vm233, %v231, 0
  %v244 = vsel %vm233, %v232, 0
  %v247 = vsel %vm233, %v43, 0
  %v250 = vsel %vm233, %v44, 0
  %v253 = vsel %vm233, %v45, 0
  %v256 = vsel %vm233, %v46, 0
  %v259 = vsel %vm233, %v47, 0
  %v262 = vsel %vm233, %v48, 0
  %v265 = vsel %vm233, %v49, 0
  %v268 = vsel %vm233, %v50, 0
  %270 = vmatprep.subr.bf16.mxu0 0
  %271 = vmatpush1.bf16.xpose.msra.mxu0 %v268
  %272 = vmatprep.subr.bf16.mxu0 0
  %273 = vmatpush1.bf16.xpose.msra.mxu0 %v265
  %274 = vmatprep.subr.bf16.mxu0 0
  %275 = vmatpush1.bf16.xpose.msra.mxu0 %v262
  %276 = vmatprep.subr.bf16.mxu0 0
  %277 = vmatpush1.bf16.xpose.msra.mxu0 %v259
  %278 = vmatprep.subr.bf16.mxu0 0
  %279 = vmatpush1.bf16.xpose.msra.mxu0 %v256
  %280 = vmatprep.subr.bf16.mxu0 0
  %281 = vmatpush1.bf16.xpose.msra.mxu0 %v253
  %282 = vmatprep.subr.bf16.mxu0 0
  %283 = vmatpush1.bf16.xpose.msra.mxu0 %v250
  %284 = vmatprep.subr.bf16.mxu0 0
  %285 = vmatpush1.bf16.xpose.msra.mxu0 %v247
  %286 = vmatprep.subr.bf16.mxu0 0
  %287 = vmatpush2.bf16.xpose.msra.mxu0 0
  %288 = vmatprep.subr.bf16.mxu0 0
  %289 = vmatpush2.bf16.xpose.msra.mxu0 0
  %290 = vmatprep.subr.bf16.mxu0 0
  %291 = vmatpush2.bf16.xpose.msra.mxu0 0
  %292 = vmatprep.subr.bf16.mxu0 0
  %293 = vmatpush2.bf16.xpose.msra.mxu0 0
  %294 = vmatprep.subr.bf16.mxu0 0
  %295 = vmatpush2.bf16.xpose.msra.mxu0 0
  %296 = vmatprep.subr.bf16.mxu0 0
  %297 = vmatpush2.bf16.xpose.msra.mxu0 0
  %298 = vmatprep.subr.bf16.mxu0 0
  %299 = vmatpush2.bf16.xpose.msra.mxu0 0
  %300 = vmatprep.subr.bf16.mxu0 0
  %301 = vmatpush2.bf16.xpose.msra.mxu0 0
  %302 = vmatprep.mubr.bf16.mxu0 0
  %303 = vmatmul.mubr.bf16.gmra.mxu0 %v235
  %v304 = vpop.f32.mrf.mxu0
  %v305 = vadd.f32 %v183, %v304
  %v306 = vpop.f32.mrf.mxu0
  %v307 = vpop.f32.mrf.mxu0
  %v308 = vadd.f32 %v186, %v307
  %v309 = vpop.f32.mrf.mxu0
  %310 = vmatprep.mubr.bf16.mxu0 0
  %311 = vmatmul.mubr.bf16.gmra.mxu0 %v238
  %v312 = vpop.f32.mrf.mxu0
  %v313 = vadd.f32 %v191, %v312
  %v314 = vpop.f32.mrf.mxu0
  %v315 = vpop.f32.mrf.mxu0
  %v316 = vadd.f32 %v194, %v315
  %v317 = vpop.f32.mrf.mxu0
  %318 = vmatprep.mubr.bf16.mxu0 0
  %319 = vmatmul.mubr.bf16.gmra.mxu0 %v241
  %v320 = vpop.f32.mrf.mxu0
  %v321 = vadd.f32 %v199, %v320
  %v322 = vpop.f32.mrf.mxu0
  %v323 = vpop.f32.mrf.mxu0
  %v324 = vadd.f32 %v202, %v323
  %v325 = vpop.f32.mrf.mxu0
  %326 = vmatprep.mubr.bf16.mxu0 0
  %327 = vmatmul.mubr.bf16.gmra.mxu0 %v244
  %v328 = vpop.f32.mrf.mxu0
  %v329 = vadd.f32 %v207, %v328
  %v330 = vpop.f32.mrf.mxu0
  %v331 = vpop.f32.mrf.mxu0
  %v332 = vadd.f32 %v210, %v331
  %v333 = vpop.f32.mrf.mxu0
  %334 = vdwg.mxu0
  %v335 = vld [vmem:[%s4] sm:$0xff]
  %v336 = vld [vmem:[%s4 + $0x8] sm:$0xff]
  %v337 = vld [vmem:[%s4 + $0x10] sm:$0xff]
  %v338 = vld [vmem:[%s4 + $0x18] sm:$0xff]
  %v339 = vld [vmem:[%s4 + $0x20] sm:$0xff]
  %v340 = vld [vmem:[%s4 + $0x28] sm:$0xff]
  %v341 = vld [vmem:[%s4 + $0x30] sm:$0xff]
  %v342 = vld [vmem:[%s4 + $0x38] sm:$0xff]
  %344 = vset.pattern.permute.xlu0 0
  %345 = vperm.xlu0 %344, %v335
  %v346 = vpop.permute.xlu0 %345
  %349 = vset.pattern.permute.xlu0 0
  %350 = vperm.xlu0 %349, %v336
  %v351 = vpop.permute.xlu0 %350
  %354 = vset.pattern.permute.xlu0 0
  %355 = vperm.xlu0 %354, %v337
  %v356 = vpop.permute.xlu0 %355
  %359 = vset.pattern.permute.xlu0 0
  %360 = vperm.xlu0 %359, %v338
  %v361 = vpop.permute.xlu0 %360
  %364 = vset.pattern.permute.xlu0 0
  %365 = vperm.xlu0 %364, %v339
  %v366 = vpop.permute.xlu0 %365
  %369 = vset.pattern.permute.xlu0 0
  %370 = vperm.xlu0 %369, %v340
  %v371 = vpop.permute.xlu0 %370
  %374 = vset.pattern.permute.xlu0 0
  %375 = vperm.xlu0 %374, %v341
  %v376 = vpop.permute.xlu0 %375
  %379 = vset.pattern.permute.xlu0 0
  %380 = vperm.xlu0 %379, %v342
  %v381 = vpop.permute.xlu0 %380
  %v383 = vadd.f32 %v305, %v346
  %v384 = vadd.f32 %v308, %v351
  %v385 = vadd.f32 %v313, %v356
  %v386 = vadd.f32 %v316, %v361
  %v387 = vadd.f32 %v321, %v366
  %v388 = vadd.f32 %v324, %v371
  %v389 = vadd.f32 %v329, %v376
  %v390 = vadd.f32 %v332, %v381
  %v391 = vmax.f32 %v383, 0.0
  %v392 = vmax.f32 %v384, 0.0
  %v393 = vmax.f32 %v385, 0.0
  %v394 = vmax.f32 %v386, 0.0
  %v395 = vmax.f32 %v387, 0.0
  %v396 = vmax.f32 %v388, 0.0
  %v397 = vmax.f32 %v389, 0.0
  %v398 = vmax.f32 %v390, 0.0
  %v399 = vld [vmem:[%s5] sm:$0xf]
  %v400 = vpack.c.bf16 %v392, %v391
  %v401 = vpack.c.bf16 %v394, %v393
  %v402 = vpack.c.bf16 %v396, %v395
  %v403 = vpack.c.bf16 %v398, %v397
  %v404 = vld [vmem:[%s6] sm:$0xff]
  %406 = vset.pattern.permute.xlu0 0
  %407 = vperm.xlu0 %406, %v404
  %v408 = vpop.permute.xlu0 %407
  %vm410 = vcmask 523264
  %v412 = vsel %vm410, %v399, 0
  %414 = vmatprep.subr.bf16.mxu0 0
  %415 = vmatpush1.bf16.msra.mxu0 0
  %416 = vmatprep.subr.bf16.mxu0 0
  %417 = vmatpush1.bf16.msra.mxu0 0
  %418 = vmatprep.subr.bf16.mxu0 0
  %419 = vmatpush1.bf16.msra.mxu0 0
  %420 = vmatprep.subr.bf16.mxu0 0
  %421 = vmatpush1.bf16.msra.mxu0 0
  %422 = vmatprep.subr.bf16.mxu0 0
  %423 = vmatpush1.bf16.msra.mxu0 %v403
  %424 = vmatprep.subr.bf16.mxu0 0
  %425 = vmatpush1.bf16.msra.mxu0 %v402
  %426 = vmatprep.subr.bf16.mxu0 0
  %427 = vmatpush1.bf16.msra.mxu0 %v401
  %428 = vmatprep.subr.bf16.mxu0 0
  %429 = vmatpush1.bf16.msra.mxu0 %v400
  %430 = vmatprep.subr.bf16.mxu0 0
  %431 = vmatpush2.bf16.msra.mxu0 0
  %432 = vmatprep.subr.bf16.mxu0 0
  %433 = vmatpush2.bf16.msra.mxu0 0
  %434 = vmatprep.subr.bf16.mxu0 0
  %435 = vmatpush2.bf16.msra.mxu0 0
  %436 = vmatprep.subr.bf16.mxu0 0
  %437 = vmatpush2.bf16.msra.mxu0 0
  %438 = vmatprep.subr.bf16.mxu0 0
  %439 = vmatpush2.bf16.msra.mxu0 0
  %440 = vmatprep.subr.bf16.mxu0 0
  %441 = vmatpush2.bf16.msra.mxu0 0
  %442 = vmatprep.subr.bf16.mxu0 0
  %443 = vmatpush2.bf16.msra.mxu0 0
  %444 = vmatprep.subr.bf16.mxu0 0
  %445 = vmatpush2.bf16.msra.mxu0 0
  %446 = vmatprep.mubr.bf16.mxu0 0
  %447 = vmatmul.mubr.bf16.gmra.mxu0 %v412
  %v448 = vpop.f32.mrf.mxu0
  %v449 = vadd.f32 %v408, %v448
  %v450 = vpop.f32.mrf.mxu0
  %v451 = vpop.f32.mrf.mxu0
  %v452 = vpop.f32.mrf.mxu0
  %453 = vdwg.mxu0
  %454 = vst [vmem:[%s7] sm:$0xff] %v449
  // Predicated region
  $region30: #{tpu_custom_call.1} parent=0 // pred_check
    _
  $region31: #{tpu_custom_call.1} parent=0 // pred_check_branch
    %456 = sbr.rel (0) target = $region33
  $region32: #{tpu_custom_call.1} parent=0 // pred_region
    _
  $region33: #{tpu_custom_call.1} parent=0 // pred_fallthru
    _
  // Predicated region
  $region34: #{tpu_custom_call.1} parent=0 // pred_check
    _
  $region35: #{tpu_custom_call.1} parent=0 // pred_check_branch
    %458 = sbr.rel (0) target = $region37
  $region36: #{tpu_custom_call.1} parent=0 // pred_region
    _
  $region37: #{tpu_custom_call.1} parent=0 // pred_fallthru
    _

</llo_original>
